<compile_context>
chip_gen: v6e
topology: v6e:2x2x1
jax: 0.10.0
libtpu: 0.0.40
codegen_flags: <defaults>
</compile_context>

<pallas_src>
from functools import partial

import jax
import jax.numpy as jnp
from jax.experimental import pallas as pl
from jax.experimental.pallas import tpu as pltpu

_BN_EPS = 1e-5
_LANE = 128
_SUBLANE_BF16 = 16  # bf16 sublane packing


def _round_up(n, m):
    return ((n + m - 1) // m) * m


def _cdiv(a, b):
    return -(-a // b)


def _mlp_kernel(x_ref, w_ref, b_ref, o_ref, *, segs):
    """Fused forward: (fc+bn folded)->relu x3, then fc4.

    x_ref : (TB, Kp)      f32   batch tile
    w_ref : (R, maxN)     bf16  all four weight matrices stacked along rows
    b_ref : (8, maxN)     f32   biases, layer i in row i
    o_ref : (TB, c_p)     f32   logits tile
    segs  : static tuple of (row_offset, K, N) per layer (16/128-aligned).
    """
    n_layers = len(segs)
    h = x_ref[...].astype(jnp.bfloat16)
    for li, (r0, k, n) in enumerate(segs):
        w = w_ref[r0:r0 + k, 0:n]                      # static, tile-aligned view
        b = b_ref[li:li + 1, 0:n]                      # (1, n) f32
        acc = jnp.dot(h, w, preferred_element_type=jnp.float32) + b
        if li + 1 < n_layers:
            h = jnp.maximum(acc, 0.0).astype(jnp.bfloat16)
        else:
            o_ref[...] = acc.astype(o_ref.dtype)


def fuse_and_pack_params(params):
    """One-time precompute (off the hot path):
    fold BN into the Linear weights (f32), pad lane dims to 128 / contraction dims
    to 16, pack everything into one bf16 weight slab + one f32 bias slab."""

    def bn_fold(w, b, bn):
        scale = bn["gamma"] / jnp.sqrt(bn["running_var"] + _BN_EPS)
        shift = bn["beta"] - bn["running_mean"] * scale
        return w * scale[None, :], b * scale + shift

    w1, b1 = bn_fold(params["fc1"]["w"], params["fc1"]["b"], params["bn1"])
    w2, b2 = bn_fold(params["fc2"]["w"], params["fc2"]["b"], params["bn2"])
    w3, b3 = bn_fold(params["fc3"]["w"], params["fc3"]["b"], params["bn3"])
    w4, b4 = params["fc4"]["w"], params["fc4"]["b"]

    f_in, h1 = w1.shape
    h2 = w3.shape[1]
    c = w4.shape[1]

    kp = _round_up(f_in, _SUBLANE_BF16)        # contraction dim: only 16-align
    h1_p = _round_up(h1, _LANE)                # lane (output) dims: 128-align
    h2_p = _round_up(h2, _LANE)
    c_p = _round_up(c, _LANE)
    max_n = max(h1_p, h2_p, c_p)

    ws = (w1, w2, w3, w4)
    bs = (b1, b2, b3, b4)
    seg_k = (kp, h1_p, h1_p, h2_p)             # rows each segment occupies
    seg_n = (h1_p, h1_p, h2_p, c_p)            # valid output width per layer

    blocks, row_off, off = [], [], 0
    for w, k in zip(ws, seg_k):
        blk = jnp.zeros((k, max_n), jnp.float32)
        blk = blk.at[:w.shape[0], :w.shape[1]].set(w)
        blocks.append(blk)
        row_off.append(off)
        off += k
    w_slab = jnp.concatenate(blocks, axis=0).astype(jnp.bfloat16)

    b_slab = jnp.zeros((8, max_n), jnp.float32)
    for i, b in enumerate(bs):
        b_slab = b_slab.at[i, :b.shape[0]].set(b)

    segs = tuple((row_off[i], seg_k[i], seg_n[i]) for i in range(4))
    meta = dict(f_in=f_in, kp=kp, c=c, c_p=c_p, max_n=max_n, segs=segs)
    return w_slab, b_slab, meta


def _resident_spec(shape):
    """Full-array, grid-constant BlockSpec. Buffered(1): never re-fetched across
    the grid, so double-buffering would only double VMEM footprint."""
    try:
        return pl.BlockSpec(shape, lambda i: (0, 0), pipeline_mode=pl.Buffered(1))
    except (TypeError, AttributeError):
        # Older jax without pipeline_mode: fall back to the default (still correct).
        return pl.BlockSpec(shape, lambda i: (0, 0))


def match_predictor_forward(x, w_slab, b_slab, meta):
    """Launch the fused Pallas kernel on the pre-fused, pre-packed params."""
    B, f_in = x.shape
    kp, c, c_p, max_n = meta["kp"], meta["c"], meta["c_p"], meta["max_n"]
    segs = meta["segs"]

    # ---- batch tiling: pad only to a 16-row multiple, rebalance tiles, and keep
    # >= 2 grid tiles when possible so v7x's second TensorCore gets work.
    tb_target = 256                           # amortizes per-step overhead; matches
    b_min = _round_up(B, _SUBLANE_BF16)       # v6e/v7x 256-wide MXU M dimension
    n_tiles = max(1, _cdiv(b_min, tb_target))
    if n_tiles == 1 and b_min >= 2 * _SUBLANE_BF16:
        n_tiles = 2
    TB = _round_up(_cdiv(b_min, n_tiles), _SUBLANE_BF16)
    B_pad = TB * n_tiles

    x_p = x
    if B_pad != B or kp != f_in:
        x_p = jnp.pad(x, ((0, B_pad - B), (0, kp - f_in)))

    # ---- explicit VMEM budget: resident slabs (single-buffered) + double-buffered
    # x/out tiles + f32/bf16 intermediates, with headroom. Capped at v7x's 64 MiB.
    wb = w_slab.size * 2
    bb = b_slab.size * 4
    xb = 2 * TB * kp * 4
    ob = 2 * TB * c_p * 4
    inter = 2 * TB * max_n * (4 + 2)
    est = wb + bb + xb + ob + inter
    vmem_limit = int(min(64 << 20, max(int(est * 1.5) + (4 << 20), 16 << 20)))

    flops = 2 * B_pad * sum(k * n for _, k, n in segs)
    bytes_accessed = B_pad * kp * 4 + B_pad * c_p * 4 + wb + bb

    out_padded = pl.pallas_call(
        partial(_mlp_kernel, segs=segs),
        out_shape=jax.ShapeDtypeStruct((B_pad, c_p), jnp.float32),
        grid=(n_tiles,),
        in_specs=[
            pl.BlockSpec((TB, kp), lambda i: (i, 0)),   # batch-tiled input
            _resident_spec(w_slab.shape),               # resident bf16 weight slab
            _resident_spec(b_slab.shape),               # resident f32 bias slab
        ],
        out_specs=pl.BlockSpec((TB, c_p), lambda i: (i, 0)),
        compiler_params=pltpu.CompilerParams(
            dimension_semantics=("parallel",),
            vmem_limit_bytes=vmem_limit,
        ),
        cost_estimate=pl.CostEstimate(
            flops=flops, transcendentals=0, bytes_accessed=bytes_accessed),
    )(x_p, w_slab, b_slab)

    return out_padded[:B, :c]


def init_params(key, input_size, hidden_size, num_classes):
    """Deterministic parameter init (shapes match the PyTorch __init__)."""
    ks = jax.random.split(key, 8)

    def linear(kw, kb, fan_in, fan_out):
        bound = 1.0 / jnp.sqrt(jnp.float32(fan_in))
        w = jax.random.uniform(kw, (fan_in, fan_out), jnp.float32, -bound, bound)
        b = jax.random.uniform(kb, (fan_out,), jnp.float32, -bound, bound)
        return {"w": w, "b": b}

    def batchnorm(features):
        return {
            "gamma": jnp.ones((features,), jnp.float32),
            "beta": jnp.zeros((features,), jnp.float32),
            "running_mean": jnp.zeros((features,), jnp.float32),
            "running_var": jnp.ones((features,), jnp.float32),
        }

    half = hidden_size // 2
    return {
        "fc1": linear(ks[0], ks[1], input_size, hidden_size),
        "fc2": linear(ks[2], ks[3], hidden_size, hidden_size),
        "fc3": linear(ks[4], ks[5], hidden_size, half),
        "fc4": linear(ks[6], ks[7], half, num_classes),
        "bn1": batchnorm(hidden_size),
        "bn2": batchnorm(hidden_size),
        "bn3": batchnorm(half),
    }


def reference_forward(x, params):
    """Pure-JAX f32 reference of the same eval-mode forward (sanity check)."""
    def bn(h, p):
        return (h - p["running_mean"]) / jnp.sqrt(p["running_var"] + _BN_EPS) * p["gamma"] + p["beta"]

    h = x @ params["fc1"]["w"] + params["fc1"]["b"]
    h = jnp.maximum(bn(h, params["bn1"]), 0.0)
    h = h @ params["fc2"]["w"] + params["fc2"]["b"]
    h = jnp.maximum(bn(h, params["bn2"]), 0.0)
    h = h @ params["fc3"]["w"] + params["fc3"]["b"]
    h = jnp.maximum(bn(h, params["bn3"]), 0.0)
    return h @ params["fc4"]["w"] + params["fc4"]["b"]


if __name__ == "__main__":
    batch = 8
    input_size = 32
    hidden_size = 32
    num_classes = 4

    key = jax.random.PRNGKey(0)
    kx, kparams = jax.random.split(key)
    x = jax.random.normal(kx, (batch, input_size), jnp.float32)
    params = init_params(kparams, input_size, hidden_size, num_classes)

    # One-time precompute (BN fold + packing + bf16 cast) — off the per-call path.
    w_slab, b_slab, meta = fuse_and_pack_params(params)

    # jit the whole wrapper so pad + pallas_call + slice dispatch as one executable.
    fwd = jax.jit(lambda xx, ws, bs: match_predictor_forward(xx, ws, bs, meta))
    out = jax.block_until_ready(fwd(x, w_slab, b_slab))

    ref = reference_forward(x, params)
    assert out.shape == (batch, num_classes)
    # bf16 weights/activations with f32 accumulation: expect ~1e-2 relative error.
    assert jnp.allclose(out, ref, atol=2e-2, rtol=2e-2), "mismatch vs JAX reference"

    print("KERNEL_OK")
</pallas_src>

<mosaic_0001>
module attributes {stable_mosaic.version = 11 : i64} {
  func.func @_mlp_kernel(%arg0: i32, %arg1: memref<16x32xf32, #tpu.memory_space<vmem>>, %arg2: memref<416x128xbf16, #tpu.memory_space<vmem>>, %arg3: memref<8x128xf32, #tpu.memory_space<vmem>>, %arg4: memref<16x128xf32, #tpu.memory_space<vmem>>) attributes {dimension_semantics = [#tpu.dimension_semantics<parallel>], iteration_bounds = array<i64: 1>, scalar_prefetch = 0 : i64, scratch_operands = 0 : i64, tpu.core_type = #tpu.core_type<tc>, window_params = [{transform_indices = @transform_0, window_bounds = array<i64: 16, 32>}, {pipeline_mode = #tpu.pipeline_mode<synchronous>, transform_indices = @transform_1, window_bounds = array<i64: 416, 128>}, {pipeline_mode = #tpu.pipeline_mode<synchronous>, transform_indices = @transform_2, window_bounds = array<i64: 8, 128>}, {transform_indices = @transform_3, window_bounds = array<i64: 16, 128>}]} {
    %c0 = arith.constant 0 : index
    %c0_0 = arith.constant 0 : index
    %0 = vector.load %arg1[%c0, %c0_0] : memref<16x32xf32, #tpu.memory_space<vmem>>, vector<16x32xf32>
    %1 = arith.truncf %0 : vector<16x32xf32> to vector<16x32xbf16>
    %c0_1 = arith.constant 0 : index
    %c0_2 = arith.constant 0 : index
    %2 = vector.load %arg2[%c0_1, %c0_2] : memref<416x128xbf16, #tpu.memory_space<vmem>>, vector<32x128xbf16>
    %c0_3 = arith.constant 0 : index
    %c0_4 = arith.constant 0 : index
    %3 = vector.load %arg3[%c0_3, %c0_4] : memref<8x128xf32, #tpu.memory_space<vmem>>, vector<1x128xf32>
    %cst = arith.constant dense<0.000000e+00> : vector<16x128xf32>
    %4 = tpu.matmul %1, %2, %cst {dimension_numbers = #tpu.dot_dimension_numbers<[1], [0], [0], [1], [0, 0, 1, 1], [], []>} : vector<16x32xbf16>, vector<32x128xbf16>, vector<16x128xf32> -> vector<16x128xf32>
    %5 = vector.broadcast %3 : vector<1x128xf32> to vector<16x128xf32>
    %6 = arith.addf %4, %5 : vector<16x128xf32>
    %cst_5 = arith.constant 0.000000e+00 : f32
    %7 = vector.broadcast %cst_5 : f32 to vector<16x128xf32>
    %8 = arith.maximumf %6, %7 : vector<16x128xf32>
    %9 = arith.truncf %8 : vector<16x128xf32> to vector<16x128xbf16>
    %c32 = arith.constant 32 : index
    %c0_6 = arith.constant 0 : index
    %10 = vector.load %arg2[%c32, %c0_6] : memref<416x128xbf16, #tpu.memory_space<vmem>>, vector<128x128xbf16>
    %c1 = arith.constant 1 : index
    %c0_7 = arith.constant 0 : index
    %11 = vector.load %arg3[%c1, %c0_7] : memref<8x128xf32, #tpu.memory_space<vmem>>, vector<1x128xf32>
    %cst_8 = arith.constant dense<0.000000e+00> : vector<16x128xf32>
    %12 = tpu.matmul %9, %10, %cst_8 {dimension_numbers = #tpu.dot_dimension_numbers<[1], [0], [0], [1], [0, 0, 1, 1], [], []>} : vector<16x128xbf16>, vector<128x128xbf16>, vector<16x128xf32> -> vector<16x128xf32>
    %13 = vector.broadcast %11 : vector<1x128xf32> to vector<16x128xf32>
    %14 = arith.addf %12, %13 : vector<16x128xf32>
    %cst_9 = arith.constant 0.000000e+00 : f32
    %15 = vector.broadcast %cst_9 : f32 to vector<16x128xf32>
    %16 = arith.maximumf %14, %15 : vector<16x128xf32>
    %17 = arith.truncf %16 : vector<16x128xf32> to vector<16x128xbf16>
    %c160 = arith.constant 160 : index
    %c0_10 = arith.constant 0 : index
    %18 = vector.load %arg2[%c160, %c0_10] : memref<416x128xbf16, #tpu.memory_space<vmem>>, vector<128x128xbf16>
    %c2 = arith.constant 2 : index
    %c0_11 = arith.constant 0 : index
    %19 = vector.load %arg3[%c2, %c0_11] : memref<8x128xf32, #tpu.memory_space<vmem>>, vector<1x128xf32>
    %cst_12 = arith.constant dense<0.000000e+00> : vector<16x128xf32>
    %20 = tpu.matmul %17, %18, %cst_12 {dimension_numbers = #tpu.dot_dimension_numbers<[1], [0], [0], [1], [0, 0, 1, 1], [], []>} : vector<16x128xbf16>, vector<128x128xbf16>, vector<16x128xf32> -> vector<16x128xf32>
    %21 = vector.broadcast %19 : vector<1x128xf32> to vector<16x128xf32>
    %22 = arith.addf %20, %21 : vector<16x128xf32>
    %cst_13 = arith.constant 0.000000e+00 : f32
    %23 = vector.broadcast %cst_13 : f32 to vector<16x128xf32>
    %24 = arith.maximumf %22, %23 : vector<16x128xf32>
    %25 = arith.truncf %24 : vector<16x128xf32> to vector<16x128xbf16>
    %c288 = arith.constant 288 : index
    %c0_14 = arith.constant 0 : index
    %26 = vector.load %arg2[%c288, %c0_14] : memref<416x128xbf16, #tpu.memory_space<vmem>>, vector<128x128xbf16>
    %c3 = arith.constant 3 : index
    %c0_15 = arith.constant 0 : index
    %27 = vector.load %arg3[%c3, %c0_15] : memref<8x128xf32, #tpu.memory_space<vmem>>, vector<1x128xf32>
    %cst_16 = arith.constant dense<0.000000e+00> : vector<16x128xf32>
    %28 = tpu.matmul %25, %26, %cst_16 {dimension_numbers = #tpu.dot_dimension_numbers<[1], [0], [0], [1], [0, 0, 1, 1], [], []>} : vector<16x128xbf16>, vector<128x128xbf16>, vector<16x128xf32> -> vector<16x128xf32>
    %29 = vector.broadcast %27 : vector<1x128xf32> to vector<16x128xf32>
    %30 = arith.addf %28, %29 : vector<16x128xf32>
    %c0_17 = arith.constant 0 : index
    %c0_18 = arith.constant 0 : index
    %31 = vector.load %arg4[%c0_17, %c0_18] : memref<16x128xf32, #tpu.memory_space<vmem>>, vector<16x128xf32>
    tpu.vector_store %arg4[%c0_17, %c0_18], %30 {strides = array<i32>} : memref<16x128xf32, #tpu.memory_space<vmem>>, vector<16x128xf32>,
    return
  }
  func.func @transform_0(%arg0: i32) -> (i32, i32) {
    %c0_i32 = arith.constant 0 : i32
    %c0_i32_0 = arith.constant 0 : i32
    return %arg0, %c0_i32 : i32, i32
  }
  func.func @transform_1(%arg0: i32) -> (i32, i32) {
    %c0_i32 = arith.constant 0 : i32
    %c0_i32_0 = arith.constant 0 : i32
    %c0_i32_1 = arith.constant 0 : i32
    return %c0_i32, %c0_i32_0 : i32, i32
  }
  func.func @transform_2(%arg0: i32) -> (i32, i32) {
    %c0_i32 = arith.constant 0 : i32
    %c0_i32_0 = arith.constant 0 : i32
    %c0_i32_1 = arith.constant 0 : i32
    return %c0_i32, %c0_i32_0 : i32, i32
  }
  func.func @transform_3(%arg0: i32) -> (i32, i32) {
    %c0_i32 = arith.constant 0 : i32
    %c0_i32_0 = arith.constant 0 : i32
    return %arg0, %c0_i32 : i32, i32
  }
}

</mosaic_0001>

<llo_original>
// kernel: _lambda_.1
$region0: #{_lambda_.1}
  #allocation0 [shape = 'u32[]', space=smem, size = 0x4, offset = 0x4, fixed_abs, tag = 'smem constant byte address 0x4 - core index']
  #allocation1 [shape = 'u32[144,128]{1,0:T(1,128)}', space=vmem, size = 0x12000, scoped, tag = 'internal scratch']
  %s0 = inlined_call_operand.vmem [shape: f32[16,32], index: 0, kind: input, shape index: {}]
  %s1 = inlined_call_operand.hbm [shape: bf16[416,128], index: 1, kind: input, shape index: {}]
  %s2 = inlined_call_operand.vmem [shape: f32[8,128], index: 2, kind: input, shape index: {}]
  %s3 = inlined_call_operand.vmem [shape: f32[16,128], index: 3, kind: output, shape index: {}]
  %s4 = sld [smem:[#allocation0]]
  $region26: #{_lambda_.1} parent=0
    _
  %s6 = ssub.s32 1, %s4
  %s7 = scalar_select 0, %s6, %s4
  $region1: #{_lambda_.1} parent=0
    #allocation2 [shape = 'u8[106496]{0}', space=vmem, size = 0x1a000, scoped, tag = 'input window, operand 1, single buffered']
    #allocation3 [shape = 's32[1]{0}', space=sflag, size = 0x4, scoped, tag = 'scoped memory for _lambda_.1']
    %8 = vsyncpa [#allocation3], 0
    // Predicated region
    $region2: #{_lambda_.1} parent=1 // pred_check
      _
    $region3: #{_lambda_.1} parent=1 // pred_check_branch
      %10 = sbr.rel (0) target = $region5
    $region4: #{_lambda_.1} parent=1 // pred_region
      _
    $region5: #{_lambda_.1} parent=1 // pred_fallthru
      _
    // Predicated region
    $region6: #{_lambda_.1} parent=1 // pred_check
      _
    $region7: #{_lambda_.1} parent=1 // pred_check_branch
      %12 = sbr.rel (0) target = $region9
    $region8: #{_lambda_.1} parent=1 // pred_region
      %s14 = ssub.s32 3328, 3328
      %15 = vsyncadd [#allocation3], %s14
      %s16 = sshll.u32 [#allocation2], 4
      %s17 = int_to_ptr.vmem [resolvable:$true] %s16
      %22 = dma.hbm_to_vmem [thread:$0]  %s1, 3328, %s17, [#allocation3], 64, 64, 4
    $region9: #{_lambda_.1} parent=1 // pred_fallthru
      _
    // Predicated region
    $region10: #{_lambda_.1} parent=1 // pred_check
      _
    $region11: #{_lambda_.1} parent=1 // pred_check_branch
      %24 = sbr.rel (0) target = $region13
    $region12: #{_lambda_.1} parent=1 // pred_region
      _
    $region13: #{_lambda_.1} parent=1 // pred_fallthru
      _
    // Predicated region
    $region14: #{_lambda_.1} parent=1 // pred_check
      _
    $region15: #{_lambda_.1} parent=1 // pred_check_branch
      %26 = sbr.rel (0) target = $region17
    $region16: #{_lambda_.1} parent=1 // pred_region
      %27 = dma.done [#allocation3], 3328
    $region17: #{_lambda_.1} parent=1 // pred_fallthru
      _
    %v29 = vld [vmem:[%s0] sm:$0xff]
    %v30 = vld [vmem:[%s0 + $0x8] sm:$0xff]
    %v31 = vpack.c.bf16 %v30, %v29
    %v32 = vld [vmem:[#allocation2] sm:$0xf]
    %v33 = vld [vmem:[#allocation2 + $0x4] sm:$0xf]
    %v34 = vld [vmem:[#allocation2 + $0x8] sm:$0xf]
    %v35 = vld [vmem:[#allocation2 + $0xc] sm:$0xf]
    %v36 = vld [vmem:[%s2] sm:$0x1]
    %v37 = vlaneseq
    %v38 = vshrl.u32 %v37, 7
    %v39 = vsub.s32 0, %v38
    %v40 = vrot.slane %v36, %v39
    %v45 = vunpack.c.l.b16 %v32
    %v46 = vunpack.c.l.b16 %v33
    %v47 = vunpack.c.l.b16 %v34
    %v48 = vunpack.c.l.b16 %v35
    %v49 = vpack.c.b16 %v46, %v45
    %v50 = vpack.c.b16 %v48, %v47
    %vm53 = vcmask 261120
    %v55 = vsel %vm53, %v31, 0
    %57 = vmatprep.subr.bf16.mxu0 0
    %58 = vmatpush1.bf16.msra.mxu0 0
    %59 = vmatprep.subr.bf16.mxu0 0
    %60 = vmatpush1.bf16.msra.mxu0 0
    %61 = vmatprep.subr.bf16.mxu0 0
    %62 = vmatpush1.bf16.msra.mxu0 0
    %63 = vmatprep.subr.bf16.mxu0 0
    %64 = vmatpush1.bf16.msra.mxu0 0
    %65 = vmatprep.subr.bf16.mxu0 0
    %66 = vmatpush1.bf16.msra.mxu0 0
    %67 = vmatprep.subr.bf16.mxu0 0
    %68 = vmatpush1.bf16.msra.mxu0 0
    %69 = vmatprep.subr.bf16.mxu0 0
    %70 = vmatpush1.bf16.msra.mxu0 %v50
    %71 = vmatprep.subr.bf16.mxu0 0
    %72 = vmatpush1.bf16.msra.mxu0 %v49
    %73 = vmatprep.subr.bf16.mxu0 0
    %74 = vmatpush2.bf16.msra.mxu0 0
    %75 = vmatprep.subr.bf16.mxu0 0
    %76 = vmatpush2.bf16.msra.mxu0 0
    %77 = vmatprep.subr.bf16.mxu0 0
    %78 = vmatpush2.bf16.msra.mxu0 0
    %79 = vmatprep.subr.bf16.mxu0 0
    %80 = vmatpush2.bf16.msra.mxu0 0
    %81 = vmatprep.subr.bf16.mxu0 0
    %82 = vmatpush2.bf16.msra.mxu0 0
    %83 = vmatprep.subr.bf16.mxu0 0
    %84 = vmatpush2.bf16.msra.mxu0 0
    %85 = vmatprep.subr.bf16.mxu0 0
    %86 = vmatpush2.bf16.msra.mxu0 0
    %87 = vmatprep.subr.bf16.mxu0 0
    %88 = vmatpush2.bf16.msra.mxu0 0
    %89 = vmatprep.mubr.bf16.mxu0 0
    %90 = vmatmul.mubr.bf16.gmra.mxu0 %v55
    %v91 = vpop.f32.mrf.mxu0
    %v92 = vadd.f32 %v40, %v91
    %v93 = vpop.f32.mrf.mxu0
    %v94 = vpop.f32.mrf.mxu0
    %v95 = vadd.f32 %v40, %v94
    %v96 = vpop.f32.mrf.mxu0
    %97 = vdwg.mxu0
    %v98 = vmax.f32 %v92, 0.0
    %v99 = vmax.f32 %v95, 0.0
    %v100 = vpack.c.bf16 %v99, %v98
    %v101 = vld [vmem:[#allocation2 + $0x10] sm:$0xf]
    %v102 = vld [vmem:[#allocation2 + $0x14] sm:$0xf]
    %v103 = vld [vmem:[#allocation2 + $0x18] sm:$0xf]
    %v104 = vld [vmem:[#allocation2 + $0x1c] sm:$0xf]
    %v105 = vld [vmem:[#allocation2 + $0x20] sm:$0xf]
    %v106 = vld [vmem:[#allocation2 + $0x24] sm:$0xf]
    %v107 = vld [vmem:[#allocation2 + $0x28] sm:$0xf]
    %v108 = vld [vmem:[#allocation2 + $0x2c] sm:$0xf]
    %v109 = vld [vmem:[#allocation2 + $0x30] sm:$0xf]
    %v110 = vld [vmem:[#allocation2 + $0x34] sm:$0xf]
    %v111 = vld [vmem:[#allocation2 + $0x38] sm:$0xf]
    %v112 = vld [vmem:[#allocation2 + $0x3c] sm:$0xf]
    %v113 = vld [vmem:[#allocation2 + $0x40] sm:$0xf]
    %v114 = vld [vmem:[#allocation2 + $0x44] sm:$0xf]
    %v115 = vld [vmem:[#allocation2 + $0x48] sm:$0xf]
    %v116 = vld [vmem:[#allocation2 + $0x4c] sm:$0xf]
    %v117 = vld [vmem:[%s2 + $0x1] sm:$0x1]
    %v118 = vlaneseq
    %v119 = vshrl.u32 %v118, 7
    %v120 = vsub.s32 0, %v119
    %v121 = vrot.slane %v117, %v120
    %v138 = vunpack.c.l.b16 %v101
    %v139 = vunpack.c.l.b16 %v102
    %v140 = vunpack.c.l.b16 %v103
    %v141 = vunpack.c.l.b16 %v104
    %v142 = vunpack.c.l.b16 %v105
    %v143 = vunpack.c.l.b16 %v106
    %v144 = vunpack.c.l.b16 %v107
    %v145 = vunpack.c.l.b16 %v108
    %v146 = vunpack.c.l.b16 %v109
    %v147 = vunpack.c.l.b16 %v110
    %v148 = vunpack.c.l.b16 %v111
    %v149 = vunpack.c.l.b16 %v112
    %v150 = vunpack.c.l.b16 %v113
    %v151 = vunpack.c.l.b16 %v114
    %v152 = vunpack.c.l.b16 %v115
    %v153 = vunpack.c.l.b16 %v116
    %v154 = vpack.c.b16 %v139, %v138
    %v155 = vpack.c.b16 %v141, %v140
    %v156 = vpack.c.b16 %v143, %v142
    %v157 = vpack.c.b16 %v145, %v144
    %v158 = vpack.c.b16 %v147, %v146
    %v159 = vpack.c.b16 %v149, %v148
    %v160 = vpack.c.b16 %v151, %v150
    %v161 = vpack.c.b16 %v153, %v152
    %170 = vmatprep.subr.bf16.mxu0 0
    %171 = vmatpush1.bf16.msra.mxu0 %v161
    %172 = vmatprep.subr.bf16.mxu0 0
    %173 = vmatpush1.bf16.msra.mxu0 %v160
    %174 = vmatprep.subr.bf16.mxu0 0
    %175 = vmatpush1.bf16.msra.mxu0 %v159
    %176 = vmatprep.subr.bf16.mxu0 0
    %177 = vmatpush1.bf16.msra.mxu0 %v158
    %178 = vmatprep.subr.bf16.mxu0 0
    %179 = vmatpush1.bf16.msra.mxu0 %v157
    %180 = vmatprep.subr.bf16.mxu0 0
    %181 = vmatpush1.bf16.msra.mxu0 %v156
    %182 = vmatprep.subr.bf16.mxu0 0
    %183 = vmatpush1.bf16.msra.mxu0 %v155
    %184 = vmatprep.subr.bf16.mxu0 0
    %185 = vmatpush1.bf16.msra.mxu0 %v154
    %186 = vmatprep.subr.bf16.mxu0 0
    %187 = vmatpush2.bf16.msra.mxu0 0
    %188 = vmatprep.subr.bf16.mxu0 0
    %189 = vmatpush2.bf16.msra.mxu0 0
    %190 = vmatprep.subr.bf16.mxu0 0
    %191 = vmatpush2.bf16.msra.mxu0 0
    %192 = vmatprep.subr.bf16.mxu0 0
    %193 = vmatpush2.bf16.msra.mxu0 0
    %194 = vmatprep.subr.bf16.mxu0 0
    %195 = vmatpush2.bf16.msra.mxu0 0
    %196 = vmatprep.subr.bf16.mxu0 0
    %197 = vmatpush2.bf16.msra.mxu0 0
    %198 = vmatprep.subr.bf16.mxu0 0
    %199 = vmatpush2.bf16.msra.mxu0 0
    %200 = vmatprep.subr.bf16.mxu0 0
    %201 = vmatpush2.bf16.msra.mxu0 0
    %202 = vmatprep.mubr.bf16.mxu0 0
    %203 = vmatmul.mubr.bf16.gmra.mxu0 %v100
    %v204 = vpop.f32.mrf.mxu0
    %v205 = vadd.f32 %v121, %v204
    %v206 = vpop.f32.mrf.mxu0
    %v207 = vpop.f32.mrf.mxu0
    %v208 = vadd.f32 %v121, %v207
    %v209 = vpop.f32.mrf.mxu0
    %210 = vdwg.mxu0
    %v211 = vmax.f32 %v205, 0.0
    %v212 = vmax.f32 %v208, 0.0
    %v213 = vpack.c.bf16 %v212, %v211
    %v214 = vld [vmem:[#allocation2 + $0x50] sm:$0xf]
    %v215 = vld [vmem:[#allocation2 + $0x54] sm:$0xf]
    %v216 = vld [vmem:[#allocation2 + $0x58] sm:$0xf]
    %v217 = vld [vmem:[#allocation2 + $0x5c] sm:$0xf]
    %v218 = vld [vmem:[#allocation2 + $0x60] sm:$0xf]
    %v219 = vld [vmem:[#allocation2 + $0x64] sm:$0xf]
    %v220 = vld [vmem:[#allocation2 + $0x68] sm:$0xf]
    %v221 = vld [vmem:[#allocation2 + $0x6c] sm:$0xf]
    %v222 = vld [vmem:[#allocation2 + $0x70] sm:$0xf]
    %v223 = vld [vmem:[#allocation2 + $0x74] sm:$0xf]
    %v224 = vld [vmem:[#allocation2 + $0x78] sm:$0xf]
    %v225 = vld [vmem:[#allocation2 + $0x7c] sm:$0xf]
    %v226 = vld [vmem:[#allocation2 + $0x80] sm:$0xf]
    %v227 = vld [vmem:[#allocation2 + $0x84] sm:$0xf]
    %v228 = vld [vmem:[#allocation2 + $0x88] sm:$0xf]
    %v229 = vld [vmem:[#allocation2 + $0x8c] sm:$0xf]
    %v230 = vld [vmem:[%s2 + $0x2] sm:$0x1]
    %v231 = vlaneseq
    %v232 = vshrl.u32 %v231, 7
    %v233 = vsub.s32 0, %v232
    %v234 = vrot.slane %v230, %v233
    %v251 = vunpack.c.l.b16 %v214
    %v252 = vunpack.c.l.b16 %v215
    %v253 = vunpack.c.l.b16 %v216
    %v254 = vunpack.c.l.b16 %v217
    %v255 = vunpack.c.l.b16 %v218
    %v256 = vunpack.c.l.b16 %v219
    %v257 = vunpack.c.l.b16 %v220
    %v258 = vunpack.c.l.b16 %v221
    %v259 = vunpack.c.l.b16 %v222
    %v260 = vunpack.c.l.b16 %v223
    %v261 = vunpack.c.l.b16 %v224
    %v262 = vunpack.c.l.b16 %v225
    %v263 = vunpack.c.l.b16 %v226
    %v264 = vunpack.c.l.b16 %v227
    %v265 = vunpack.c.l.b16 %v228
    %v266 = vunpack.c.l.b16 %v229
    %v267 = vpack.c.b16 %v252, %v251
    %v268 = vpack.c.b16 %v254, %v253
    %v269 = vpack.c.b16 %v256, %v255
    %v270 = vpack.c.b16 %v258, %v257
    %v271 = vpack.c.b16 %v260, %v259
    %v272 = vpack.c.b16 %v262, %v261
    %v273 = vpack.c.b16 %v264, %v263
    %v274 = vpack.c.b16 %v266, %v265
    %283 = vmatprep.subr.bf16.mxu0 0
    %284 = vmatpush1.bf16.msra.mxu0 %v274
    %285 = vmatprep.subr.bf16.mxu0 0
    %286 = vmatpush1.bf16.msra.mxu0 %v273
    %287 = vmatprep.subr.bf16.mxu0 0
    %288 = vmatpush1.bf16.msra.mxu0 %v272
    %289 = vmatprep.subr.bf16.mxu0 0
    %290 = vmatpush1.bf16.msra.mxu0 %v271
    %291 = vmatprep.subr.bf16.mxu0 0
    %292 = vmatpush1.bf16.msra.mxu0 %v270
    %293 = vmatprep.subr.bf16.mxu0 0
    %294 = vmatpush1.bf16.msra.mxu0 %v269
    %295 = vmatprep.subr.bf16.mxu0 0
    %296 = vmatpush1.bf16.msra.mxu0 %v268
    %297 = vmatprep.subr.bf16.mxu0 0
    %298 = vmatpush1.bf16.msra.mxu0 %v267
    %299 = vmatprep.subr.bf16.mxu0 0
    %300 = vmatpush2.bf16.msra.mxu0 0
    %301 = vmatprep.subr.bf16.mxu0 0
    %302 = vmatpush2.bf16.msra.mxu0 0
    %303 = vmatprep.subr.bf16.mxu0 0
    %304 = vmatpush2.bf16.msra.mxu0 0
    %305 = vmatprep.subr.bf16.mxu0 0
    %306 = vmatpush2.bf16.msra.mxu0 0
    %307 = vmatprep.subr.bf16.mxu0 0
    %308 = vmatpush2.bf16.msra.mxu0 0
    %309 = vmatprep.subr.bf16.mxu0 0
    %310 = vmatpush2.bf16.msra.mxu0 0
    %311 = vmatprep.subr.bf16.mxu0 0
    %312 = vmatpush2.bf16.msra.mxu0 0
    %313 = vmatprep.subr.bf16.mxu0 0
    %314 = vmatpush2.bf16.msra.mxu0 0
    %315 = vmatprep.mubr.bf16.mxu0 0
    %316 = vmatmul.mubr.bf16.gmra.mxu0 %v213
    %v317 = vpop.f32.mrf.mxu0
    %v318 = vadd.f32 %v234, %v317
    %v319 = vpop.f32.mrf.mxu0
    %v320 = vpop.f32.mrf.mxu0
    %v321 = vadd.f32 %v234, %v320
    %v322 = vpop.f32.mrf.mxu0
    %323 = vdwg.mxu0
    %v324 = vmax.f32 %v318, 0.0
    %v325 = vmax.f32 %v321, 0.0
    %v326 = vpack.c.bf16 %v325, %v324
    %v327 = vld [vmem:[#allocation2 + $0x90] sm:$0xf]
    %v328 = vld [vmem:[#allocation2 + $0x94] sm:$0xf]
    %v329 = vld [vmem:[#allocation2 + $0x98] sm:$0xf]
    %v330 = vld [vmem:[#allocation2 + $0x9c] sm:$0xf]
    %v331 = vld [vmem:[#allocation2 + $0xa0] sm:$0xf]
    %v332 = vld [vmem:[#allocation2 + $0xa4] sm:$0xf]
    %v333 = vld [vmem:[#allocation2 + $0xa8] sm:$0xf]
    %v334 = vld [vmem:[#allocation2 + $0xac] sm:$0xf]
    %v335 = vld [vmem:[#allocation2 + $0xb0] sm:$0xf]
    %v336 = vld [vmem:[#allocation2 + $0xb4] sm:$0xf]
    %v337 = vld [vmem:[#allocation2 + $0xb8] sm:$0xf]
    %v338 = vld [vmem:[#allocation2 + $0xbc] sm:$0xf]
    %v339 = vld [vmem:[#allocation2 + $0xc0] sm:$0xf]
    %v340 = vld [vmem:[#allocation2 + $0xc4] sm:$0xf]
    %v341 = vld [vmem:[#allocation2 + $0xc8] sm:$0xf]
    %v342 = vld [vmem:[#allocation2 + $0xcc] sm:$0xf]
    %v343 = vld [vmem:[%s2 + $0x3] sm:$0x1]
    %v344 = vlaneseq
    %v345 = vshrl.u32 %v344, 7
    %v346 = vsub.s32 0, %v345
    %v347 = vrot.slane %v343, %v346
    %v364 = vunpack.c.l.b16 %v327
    %v365 = vunpack.c.l.b16 %v328
    %v366 = vunpack.c.l.b16 %v329
    %v367 = vunpack.c.l.b16 %v330
    %v368 = vunpack.c.l.b16 %v331
    %v369 = vunpack.c.l.b16 %v332
    %v370 = vunpack.c.l.b16 %v333
    %v371 = vunpack.c.l.b16 %v334
    %v372 = vunpack.c.l.b16 %v335
    %v373 = vunpack.c.l.b16 %v336
    %v374 = vunpack.c.l.b16 %v337
    %v375 = vunpack.c.l.b16 %v338
    %v376 = vunpack.c.l.b16 %v339
    %v377 = vunpack.c.l.b16 %v340
    %v378 = vunpack.c.l.b16 %v341
    %v379 = vunpack.c.l.b16 %v342
    %v380 = vpack.c.b16 %v365, %v364
    %v381 = vpack.c.b16 %v367, %v366
    %v382 = vpack.c.b16 %v369, %v368
    %v383 = vpack.c.b16 %v371, %v370
    %v384 = vpack.c.b16 %v373, %v372
    %v385 = vpack.c.b16 %v375, %v374
    %v386 = vpack.c.b16 %v377, %v376
    %v387 = vpack.c.b16 %v379, %v378
    %396 = vmatprep.subr.bf16.mxu0 0
    %397 = vmatpush1.bf16.msra.mxu0 %v387
    %398 = vmatprep.subr.bf16.mxu0 0
    %399 = vmatpush1.bf16.msra.mxu0 %v386
    %400 = vmatprep.subr.bf16.mxu0 0
    %401 = vmatpush1.bf16.msra.mxu0 %v385
    %402 = vmatprep.subr.bf16.mxu0 0
    %403 = vmatpush1.bf16.msra.mxu0 %v384
    %404 = vmatprep.subr.bf16.mxu0 0
    %405 = vmatpush1.bf16.msra.mxu0 %v383
    %406 = vmatprep.subr.bf16.mxu0 0
    %407 = vmatpush1.bf16.msra.mxu0 %v382
    %408 = vmatprep.subr.bf16.mxu0 0
    %409 = vmatpush1.bf16.msra.mxu0 %v381
    %410 = vmatprep.subr.bf16.mxu0 0
    %411 = vmatpush1.bf16.msra.mxu0 %v380
    %412 = vmatprep.subr.bf16.mxu0 0
    %413 = vmatpush2.bf16.msra.mxu0 0
    %414 = vmatprep.subr.bf16.mxu0 0
    %415 = vmatpush2.bf16.msra.mxu0 0
    %416 = vmatprep.subr.bf16.mxu0 0
    %417 = vmatpush2.bf16.msra.mxu0 0
    %418 = vmatprep.subr.bf16.mxu0 0
    %419 = vmatpush2.bf16.msra.mxu0 0
    %420 = vmatprep.subr.bf16.mxu0 0
    %421 = vmatpush2.bf16.msra.mxu0 0
    %422 = vmatprep.subr.bf16.mxu0 0
    %423 = vmatpush2.bf16.msra.mxu0 0
    %424 = vmatprep.subr.bf16.mxu0 0
    %425 = vmatpush2.bf16.msra.mxu0 0
    %426 = vmatprep.subr.bf16.mxu0 0
    %427 = vmatpush2.bf16.msra.mxu0 0
    %428 = vmatprep.mubr.bf16.mxu0 0
    %429 = vmatmul.mubr.bf16.gmra.mxu0 %v326
    %v430 = vpop.f32.mrf.mxu0
    %v431 = vadd.f32 %v347, %v430
    %v432 = vpop.f32.mrf.mxu0
    %v433 = vpop.f32.mrf.mxu0
    %v434 = vadd.f32 %v347, %v433
    %v435 = vpop.f32.mrf.mxu0
    %436 = vdwg.mxu0
    %437 = vst [vmem:[%s3] sm:$0xff] %v431
    %438 = vst [vmem:[%s3 + $0x8] sm:$0xff] %v434
    // Predicated region
    $region18: #{_lambda_.1} parent=1 // pred_check
      _
    $region19: #{_lambda_.1} parent=1 // pred_check_branch
      %440 = sbr.rel (0) target = $region21
    $region20: #{_lambda_.1} parent=1 // pred_region
      _
    $region21: #{_lambda_.1} parent=1 // pred_fallthru
      _
    // Predicated region
    $region22: #{_lambda_.1} parent=1 // pred_check
      _
    $region23: #{_lambda_.1} parent=1 // pred_check_branch
      %442 = sbr.rel (0) target = $region25
    $region24: #{_lambda_.1} parent=1 // pred_region
      _
    $region25: #{_lambda_.1} parent=1 // pred_fallthru
      _
    %443 = vsyncpa [#allocation3], 1

</llo_original>
